<compile_context>
chip_gen: v7x
topology: tpu7x:2x2x1
jax: 0.10.0
libtpu: 0.0.40
codegen_flags: <defaults>
</compile_context>

<pallas_src>
import jax
import jax.numpy as jnp
from jax.experimental import pallas as pl
from jax.experimental.pallas import tpu as pltpu

NUM_CLASSES = 10
C_PAD = 128                     # lane-dense class dimension (in-kernel only)
NEG_INF = -1e30                 # finite "minus infinity" for padded class bias


def _round_up(n, m):
    return ((n + m - 1) // m) * m


def _classifier_kernel(x_ref, w_ref, b_ref, o_ref):
    # x_ref: (TM, F) f32   w_ref: (F, C_PAD) bf16
    # b_ref: (1, C_PAD) f32   o_ref: (TM, NUM_CLASSES) f32
    x = x_ref[...].astype(jnp.bfloat16)                 # cast hides under DMA
    logits = jnp.dot(x, w_ref[...], preferred_element_type=jnp.float32)
    logits = logits + b_ref[...]                        # broadcast bias over batch
    # Numerically stable softmax over the lane-dense (padded) class axis;
    # pad columns have bias = NEG_INF so exp() underflows to exactly 0.
    m = jnp.max(logits, axis=1, keepdims=True)          # full-lane XLU reduce
    e = jnp.exp(logits - m)
    denom = jnp.sum(e, axis=1, keepdims=True)
    probs = e[:, :NUM_CLASSES] * pl.reciprocal(denom, approx=False)
    o_ref[...] = probs.astype(o_ref.dtype)


def classifier_forward(x, w, b, *, tm=2048):
    """Classifier forward: softmax(x @ w.T + b, axis=1).

    x: (B, F) float32
    w: (C, F) float32  -- nn.Linear weight layout
    b: (C,)   float32
    returns (B, C) float32 probabilities.
    """
    B, F = x.shape
    C, _ = w.shape
    assert C <= C_PAD

    # --- lane-dense class padding for W / bias (tiny, one-time) -------------
    w_t_pad = jnp.zeros((F, C_PAD), jnp.bfloat16).at[:, :C].set(
        w.T.astype(jnp.bfloat16))
    b_pad = jnp.full((1, C_PAD), NEG_INF, jnp.float32).at[0, :C].set(
        b.astype(jnp.float32))

    # --- batch tile: multiple of 16 (bf16 sublane packing); for large batches
    #     cap so the grid has >= ~4 steps (lets v7x shard across both TCs) ----
    TM = min(tm, max(512, _round_up(pl.cdiv(B, 4), 16)))
    TM = min(TM, _round_up(B, 16))       # never exceed the (rounded) batch
    grid = (pl.cdiv(B, TM),)             # edge block handled by Pallas

    cost = pl.CostEstimate(
        flops=2 * B * F * C_PAD,
        transcendentals=B * C_PAD,
        bytes_accessed=(x.size * 4 + w_t_pad.size * 2 + b_pad.size * 4
                        + B * C * 4),
    )

    out = pl.pallas_call(
        _classifier_kernel,
        out_shape=jax.ShapeDtypeStruct((B, C), jnp.float32),
        grid_spec=pl.GridSpec(
            grid=grid,
            in_specs=[
                pl.BlockSpec((TM, F), lambda i: (i, 0)),        # x tile, pipelined
                pl.BlockSpec((F, C_PAD), lambda i: (0, 0)),     # W resident
                pl.BlockSpec((1, C_PAD), lambda i: (0, 0)),     # bias resident
            ],
            out_specs=pl.BlockSpec((TM, C), lambda i: (i, 0)),  # narrow output
        ),
        compiler_params=pltpu.CompilerParams(
            dimension_semantics=("parallel",),                  # megacore on v7x
        ),
        cost_estimate=cost,
    )(x, w_t_pad, b_pad)

    return out


def reference_forward(x, w, b):
    logits = x @ w.T + b[None, :]
    return jax.nn.softmax(logits, axis=1)


if __name__ == "__main__":
    key = jax.random.PRNGKey(0)
    k_x, k_w, k_b = jax.random.split(key, 3)

    B = 20                 # small batch (exercises multi-step grid + edge block)
    IN_FEATURES = 64       # matches Classifier default input_features=64

    # Deterministic parameter init mimicking nn.Linear default
    # (uniform in [-1/sqrt(in_features), 1/sqrt(in_features)]).
    bound = 1.0 / (IN_FEATURES ** 0.5)
    w = jax.random.uniform(k_w, (NUM_CLASSES, IN_FEATURES),
                           minval=-bound, maxval=bound, dtype=jnp.float32)
    b = jax.random.uniform(k_b, (NUM_CLASSES,),
                           minval=-bound, maxval=bound, dtype=jnp.float32)
    x = jax.random.normal(k_x, (B, IN_FEATURES), dtype=jnp.float32)

    # tm=16 here so the grid has multiple steps and a partial edge block at
    # this tiny batch; leave the default (2048) for real workloads.
    out = classifier_forward(x, w, b, tm=16)
    out = jax.block_until_ready(out)

    ref = reference_forward(x, w, b)
    assert out.shape == (B, NUM_CLASSES)
    # bf16 matmul inputs perturb logits at ~1e-2 relative -> loosened tolerance.
    assert jnp.allclose(out, ref, atol=1e-2, rtol=1e-2), "mismatch vs reference"
    # rows of a softmax sum to 1 (exact reciprocal -> only f32 rounding slack)
    assert jnp.allclose(jnp.sum(out, axis=1), jnp.ones((B,)), atol=1e-3)

    print("KERNEL_OK")
</pallas_src>

<mosaic_0001>
module attributes {stable_mosaic.version = 11 : i64} {
  func.func @_classifier_kernel(%arg0: i32, %arg1: memref<16x64xf32, #tpu.memory_space<vmem>>, %arg2: memref<64x128xbf16, #tpu.memory_space<vmem>>, %arg3: memref<1x128xf32, #tpu.memory_space<vmem>>, %arg4: memref<16x10xf32, #tpu.memory_space<vmem>>) attributes {dimension_semantics = [#tpu.dimension_semantics<parallel>], iteration_bounds = array<i64: 2>, scalar_prefetch = 0 : i64, scratch_operands = 0 : i64, tpu.core_type = #tpu.core_type<tc>, window_params = [{transform_indices = @transform_0, window_bounds = array<i64: 16, 64>}, {pipeline_mode = #tpu.pipeline_mode<synchronous>, transform_indices = @transform_1, window_bounds = array<i64: 64, 128>}, {pipeline_mode = #tpu.pipeline_mode<synchronous>, transform_indices = @transform_2, window_bounds = array<i64: 1, 128>}, {transform_indices = @transform_3, window_bounds = array<i64: 16, 10>}]} {
    %c0 = arith.constant 0 : index
    %c0_0 = arith.constant 0 : index
    %0 = vector.load %arg1[%c0, %c0_0] : memref<16x64xf32, #tpu.memory_space<vmem>>, vector<16x64xf32>
    %1 = arith.truncf %0 : vector<16x64xf32> to vector<16x64xbf16>
    %c0_1 = arith.constant 0 : index
    %c0_2 = arith.constant 0 : index
    %2 = vector.load %arg2[%c0_1, %c0_2] : memref<64x128xbf16, #tpu.memory_space<vmem>>, vector<64x128xbf16>
    %cst = arith.constant dense<0.000000e+00> : vector<16x128xf32>
    %3 = tpu.matmul %1, %2, %cst {dimension_numbers = #tpu.dot_dimension_numbers<[1], [0], [0], [1], [0, 0, 1, 1], [], []>} : vector<16x64xbf16>, vector<64x128xbf16>, vector<16x128xf32> -> vector<16x128xf32>
    %c0_3 = arith.constant 0 : index
    %c0_4 = arith.constant 0 : index
    %4 = vector.load %arg3[%c0_3, %c0_4] : memref<1x128xf32, #tpu.memory_space<vmem>>, vector<1x128xf32>
    %5 = vector.broadcast %4 : vector<1x128xf32> to vector<16x128xf32>
    %6 = arith.addf %3, %5 : vector<16x128xf32>
    %cst_5 = arith.constant dense<0xFF800000> : vector<16xf32>
    %7 = vector.multi_reduction <maximumf>, %6, %cst_5 [1] : vector<16x128xf32> to vector<16xf32>
    %8 = vector.shape_cast %7 : vector<16xf32> to vector<16x1xf32>
    %9 = vector.broadcast %8 : vector<16x1xf32> to vector<16x128xf32>
    %10 = arith.subf %6, %9 : vector<16x128xf32>
    %11 = math.exp %10 : vector<16x128xf32>
    %cst_6 = arith.constant dense<0.000000e+00> : vector<16xf32>
    %12 = vector.multi_reduction <add>, %11, %cst_6 [1] : vector<16x128xf32> to vector<16xf32>
    %13 = vector.shape_cast %12 : vector<16xf32> to vector<16x1xf32>
    %14 = vector.extract_strided_slice %11 {offsets = [0, 0], sizes = [16, 10], strides = [1, 1]} : vector<16x128xf32> to vector<16x10xf32>
    %15 = tpu.reciprocal %13 : vector<16x1xf32> -> vector<16x1xf32>
    %16 = vector.broadcast %15 : vector<16x1xf32> to vector<16x10xf32>
    %17 = arith.mulf %14, %16 : vector<16x10xf32>
    %c0_7 = arith.constant 0 : index
    %c0_8 = arith.constant 0 : index
    %18 = vector.load %arg4[%c0_7, %c0_8] : memref<16x10xf32, #tpu.memory_space<vmem>>, vector<16x10xf32>
    tpu.vector_store %arg4[%c0_7, %c0_8], %17 {strides = array<i32>} : memref<16x10xf32, #tpu.memory_space<vmem>>, vector<16x10xf32>,
    return
  }
  func.func @transform_0(%arg0: i32) -> (i32, i32) {
    %c0_i32 = arith.constant 0 : i32
    %c0_i32_0 = arith.constant 0 : i32
    return %arg0, %c0_i32 : i32, i32
  }
  func.func @transform_1(%arg0: i32) -> (i32, i32) {
    %c0_i32 = arith.constant 0 : i32
    %c0_i32_0 = arith.constant 0 : i32
    %c0_i32_1 = arith.constant 0 : i32
    return %c0_i32, %c0_i32_0 : i32, i32
  }
  func.func @transform_2(%arg0: i32) -> (i32, i32) {
    %c0_i32 = arith.constant 0 : i32
    %c0_i32_0 = arith.constant 0 : i32
    %c0_i32_1 = arith.constant 0 : i32
    return %c0_i32, %c0_i32_0 : i32, i32
  }
  func.func @transform_3(%arg0: i32) -> (i32, i32) {
    %c0_i32 = arith.constant 0 : i32
    %c0_i32_0 = arith.constant 0 : i32
    return %arg0, %c0_i32 : i32, i32
  }
}

</mosaic_0001>

<llo_original>
// kernel: tpu_custom_call.1
$region0: #{tpu_custom_call.1}
  #allocation0 [shape = 'u32[]', space=smem, size = 0x4, offset = 0x4, fixed_abs, tag = 'smem constant byte address 0x4 - core index']
  #allocation1 [shape = 'u32[144,128]{1,0:T(1,128)}', space=vmem, size = 0x12000, scoped, tag = 'internal scratch']
  %s0 = inlined_call_operand.hbm [shape: f32[20,64], index: 0, kind: input, shape index: {}]
  %s1 = inlined_call_operand.hbm [shape: bf16[64,128], index: 1, kind: input, shape index: {}]
  %s2 = inlined_call_operand.vmem [shape: f32[1,128], index: 2, kind: input, shape index: {}]
  %s3 = inlined_call_operand.vmem [shape: f32[20,10], index: 3, kind: output, shape index: {}]
  %s4 = sld [smem:[#allocation0]]
  $region101: #{tpu_custom_call.1} parent=0
    _
  %s6 = ssub.s32 1, %s4
  %s7 = scalar_select 0, %s6, %s4
  $region1: #{tpu_custom_call.1} parent=0
    #allocation2 [shape = 'u8[16384]{0}', space=vmem, size = 0x4000, scoped, tag = 'input window, operand 0']
    #allocation3 [shape = 's32[2]{0}', space=sflag, size = 0x8, scoped, tag = 'scoped memory for tpu_custom_call.1']
    #allocation4 [shape = 'u8[16384]{0}', space=vmem, size = 0x4000, scoped, tag = 'input window, operand 1, single buffered']
    #allocation5 [shape = 's32[1]{0}', space=sflag, size = 0x4, scoped, tag = 'scoped memory for tpu_custom_call.1']
    #allocation6 [shape = 'u8[16384]{0}', space=vmem, size = 0x4000, scoped, tag = 'output window, operand 0']
    %8 = vsyncpa [#allocation3], 0
    %s9 = scalar_lea.sflag [#allocation3], 1
    %10 = vsyncpa %s9, 0
    %11 = vsyncpa [#allocation5], 0
    loop: start=0, step=1, limit=4
    $region2: #{tpu_custom_call.1} parent=1 // loop_pre_header
      _
    $region3: #{tpu_custom_call.1} parent=1 // loop_header
      %s13 = sphi 0, %s17
      %p14 = scmp.ge.s32.totalorder %s13, 4
      %s23 = sphi 0, %s25
      %s26 = sphi 0, %s23
      %s27 = sphi 0, %s26
      %s43 = sphi 0, %s27
      %s47 = sphi 0, %s47
      %s49 = sphi 0, %s47
      %s50 = sphi 0, %s49
      %s64 = sphi 0, %s50
      %s68 = sphi 0, %s68
      %s70 = sphi 0, %s68
      %s71 = sphi 0, %s70
      %s85 = sphi 0, %s71
      %s91 = sphi 0, %s93
      %s94 = sphi 0, %s91
      %s95 = sphi 0, %s94
      %s111 = sphi 0, %s95
    $region4: #{tpu_custom_call.1} parent=1 // loop_header_branch
      %16 = sbr.rel (%p14) target = $region8
    $region5: #{tpu_custom_call.1} parent=1 // loop_body
      %s18 = ssub.s32 %s13, 1
      %s19 = ssub.s32 %s13, 2
      %s20 = sadd.s32 %s13, 1
      %s21 = ssub.s32 %s13, %s20
      %p22 = scmp.eq.s32.totalorder %s21, 0
      %s24 = sadd.s32 %s23, 1
      %s25 = scalar_select %p22, %s23, %s24
      %p28 = pneg %p22
      %p29 = scmp.eq.s32.totalorder %s13, 1
      %p30 = por %p28, %p29
      %p31 = scmp.ne.s32.totalorder %s23, %s26
      %p32 = scmp.eq.s32.totalorder %s13, 0
      %p33 = por %p31, %p32
      %p34 = scmp.ne.s32.totalorder %s23, %s26
      %p35 = scmp.eq.s32.totalorder %s18, 1
      %p36 = por %p34, %p35
      %p37 = scmp.ne.s32.totalorder %s26, %s27
      %p38 = scmp.eq.s32.totalorder %s18, 0
      %p39 = por %p37, %p38
      %p40 = scmp.ne.s32.totalorder %s26, %s27
      %p41 = scmp.eq.s32.totalorder %s19, 1
      %p42 = por %p40, %p41
      %p44 = scmp.ne.s32.totalorder %s27, %s43
      %p45 = scmp.eq.s32.totalorder %s19, 0
      %p46 = por %p44, %p45
      %s48 = sadd.s32 %s47, 1
      %p51 = scmp.eq.s32.totalorder %s13, 1
      %p52 = scmp.ne.s32.totalorder %s47, %s49
      %p53 = scmp.eq.s32.totalorder %s13, 0
      %p54 = por %p52, %p53
      %p55 = scmp.ne.s32.totalorder %s47, %s49
      %p56 = scmp.eq.s32.totalorder %s18, 1
      %p57 = por %p55, %p56
      %p58 = scmp.ne.s32.totalorder %s49, %s50
      %p59 = scmp.eq.s32.totalorder %s18, 0
      %p60 = por %p58, %p59
      %p61 = scmp.ne.s32.totalorder %s49, %s50
      %p62 = scmp.eq.s32.totalorder %s19, 1
      %p63 = por %p61, %p62
      %p65 = scmp.ne.s32.totalorder %s50, %s64
      %p66 = scmp.eq.s32.totalorder %s19, 0
      %p67 = por %p65, %p66
      %s69 = sadd.s32 %s68, 1
      %p72 = scmp.eq.s32.totalorder %s13, 1
      %p73 = scmp.ne.s32.totalorder %s68, %s70
      %p74 = scmp.eq.s32.totalorder %s13, 0
      %p75 = por %p73, %p74
      %p76 = scmp.ne.s32.totalorder %s68, %s70
      %p77 = scmp.eq.s32.totalorder %s18, 1
      %p78 = por %p76, %p77
      %p79 = scmp.ne.s32.totalorder %s70, %s71
      %p80 = scmp.eq.s32.totalorder %s18, 0
      %p81 = por %p79, %p80
      %p82 = scmp.ne.s32.totalorder %s70, %s71
      %p83 = scmp.eq.s32.totalorder %s19, 1
      %p84 = por %p82, %p83
      %p86 = scmp.ne.s32.totalorder %s71, %s85
      %p87 = scmp.eq.s32.totalorder %s19, 0
      %p88 = por %p86, %p87
      %s89 = ssub.s32 %s13, %s20
      %p90 = scmp.eq.s32.totalorder %s89, 0
      %s92 = sadd.s32 %s91, 1
      %s93 = scalar_select %p90, %s91, %s92
      %p96 = pneg %p90
      %p97 = scmp.eq.s32.totalorder %s13, 1
      %p98 = por %p96, %p97
      %p99 = scmp.ne.s32.totalorder %s91, %s94
      %p100 = scmp.eq.s32.totalorder %s13, 0
      %p101 = por %p99, %p100
      %p102 = scmp.ne.s32.totalorder %s91, %s94
      %p103 = scmp.eq.s32.totalorder %s18, 1
      %p104 = por %p102, %p103
      %p105 = scmp.ne.s32.totalorder %s94, %s95
      %p106 = scmp.eq.s32.totalorder %s18, 0
      %p107 = por %p105, %p106
      %p108 = scmp.ne.s32.totalorder %s94, %s95
      %p109 = scmp.eq.s32.totalorder %s19, 1
      %p110 = por %p108, %p109
      %p112 = scmp.ne.s32.totalorder %s95, %s111
      %p113 = scmp.eq.s32.totalorder %s19, 0
      %p114 = por %p112, %p113
      %p115 = scmp.le.s32.totalorder 1, %s13
      %p116 = scmp.lt.s32.totalorder %s13, 3
      %p117 = pnand %p115, %p116
      %p118 = pneg %p117
      // Predicated region
      $region9: #{tpu_custom_call.1} parent=5 // pred_check
        _
      $region10: #{tpu_custom_call.1} parent=5 // pred_check_branch
        %120 = sbr.rel (%p117) target = $region12
      $region11: #{tpu_custom_call.1} parent=5 // pred_region
        %s121 = ssub.s32 %s13, 1
        // Predicated region
        $region13: #{tpu_custom_call.1} parent=11 // pred_check
          %p122 = pneg %p60
        $region14: #{tpu_custom_call.1} parent=11 // pred_check_branch
          %124 = sbr.rel (%p122) target = $region16
        $region15: #{tpu_custom_call.1} parent=11 // pred_region
          %s126 = ssub.s32 512, 512
          %127 = vsyncadd [#allocation5], %s126
          %s128 = sshll.u32 [#allocation4], 4
          %s129 = int_to_ptr.vmem [resolvable:$true] %s128
          %134 = dma.hbm_to_vmem [thread:$0]  %s1, 512, %s129, [#allocation5], 64, 64, 4
        $region16: #{tpu_custom_call.1} parent=11 // pred_fallthru
          _
        // Predicated region
        $region17: #{tpu_custom_call.1} parent=11 // pred_check
          %p135 = pneg %p81
        $region18: #{tpu_custom_call.1} parent=11 // pred_check_branch
          %137 = sbr.rel (%p135) target = $region20
        $region19: #{tpu_custom_call.1} parent=11 // pred_region
          _
        $region20: #{tpu_custom_call.1} parent=11 // pred_fallthru
          _
      $region12: #{tpu_custom_call.1} parent=5 // pred_fallthru
        _
      %p138 = scmp.lt.s32.totalorder %s13, 2
      // Predicated region
      $region21: #{tpu_custom_call.1} parent=5 // pred_check
        %p139 = pneg %p138
      $region22: #{tpu_custom_call.1} parent=5 // pred_check_branch
        %141 = sbr.rel (%p139) target = $region24
      $region23: #{tpu_custom_call.1} parent=5 // pred_region
        // Predicated region
        $region25: #{tpu_custom_call.1} parent=23 // pred_check
          %p142 = pneg %p33
        $region26: #{tpu_custom_call.1} parent=23 // pred_check_branch
          %144 = sbr.rel (%p142) target = $region28
        $region27: #{tpu_custom_call.1} parent=23 // pred_region
          %s145 = sand.u32 %s23, 1
          %s146 = scalar_lea.sflag [#allocation3], %s145
          %s147 = sand.u32 %s23, 1
          %s148 = smul.addr %s147, 16
          %s149 = scalar_lea.vmem [#allocation2], %s148
          %s150 = smul.u32 2, %s13
          %s151 = ssub.s32 3, %s150
          %p152 = scmp.lt.s32.totalorder %s151, 2
          %s153 = scalar_select %p152, %s151, 2
          %s154 = smul.u32 128, %s153
          %s156 = ssub.s32 256, %s154
          %157 = vsyncadd %s146, %s156
          %p158 = scmp.ne.s32.totalorder 0, %s154
          %s159 = smul.addr %s150, 128
          %s160 = scalar_lea.hbm %s0, %s159
          %s161 = smul.u32 8, %s153
          %s162 = sshll.u32 %s149, 4
          %s163 = int_to_ptr.vmem [resolvable:$true] %s162
          %s164 = sshll.u32 %s161, 4
          %168 = dma.hbm_to_vmem [thread:$0]  (%p158), %s160, %s164, %s163, %s146, 128, 128, 8
        $region28: #{tpu_custom_call.1} parent=23 // pred_fallthru
          _
      $region24: #{tpu_custom_call.1} parent=5 // pred_fallthru
        _
      %p169 = scmp.le.s32.totalorder 1, %s13
      %p170 = scmp.lt.s32.totalorder %s13, 3
      %p171 = pnand %p169, %p170
      %p172 = pneg %p171
      // Predicated region
      $region29: #{tpu_custom_call.1} parent=5 // pred_check
        _
      $region30: #{tpu_custom_call.1} parent=5 // pred_check_branch
        %174 = sbr.rel (%p171) target = $region32
      $region31: #{tpu_custom_call.1} parent=5 // pred_region
        %s175 = ssub.s32 %s13, 1
        %s176 = sand.u32 %s26, 1
        %s177 = scalar_lea.sflag [#allocation3], %s176
        %s178 = sand.u32 %s26, 1
        %s179 = smul.addr %s178, 16
        %s180 = scalar_lea.vmem [#allocation2], %s179
        // Predicated region
        $region33: #{tpu_custom_call.1} parent=31 // pred_check
          %p181 = pneg %p39
        $region34: #{tpu_custom_call.1} parent=31 // pred_check_branch
          %183 = sbr.rel (%p181) target = $region36
        $region35: #{tpu_custom_call.1} parent=31 // pred_region
          %184 = dma.done %s177, 256
        $region36: #{tpu_custom_call.1} parent=31 // pred_fallthru
          _
        // Predicated region
        $region37: #{tpu_custom_call.1} parent=31 // pred_check
          %p185 = pneg %p60
        $region38: #{tpu_custom_call.1} parent=31 // pred_check_branch
          %187 = sbr.rel (%p185) target = $region40
        $region39: #{tpu_custom_call.1} parent=31 // pred_region
          %188 = dma.done [#allocation5], 512
        $region40: #{tpu_custom_call.1} parent=31 // pred_fallthru
          _
        %s189 = sand.u32 %s26, 1
        %s190 = scalar_lea.sflag [#allocation3], %s189
        %s191 = sand.u32 %s26, 1
        %s192 = smul.addr %s191, 16
        %s193 = scalar_lea.vmem [#allocation2], %s192
        %p194 = pneg %p39
        %p195 = pneg %p36
        %p196 = pneg %p60
        %p197 = pneg %p57
        %p198 = pneg %p81
        %p199 = pneg %p78
        %p200 = pneg %p107
        %p201 = pneg %p104
        %s202 = sand.u32 %s94, 1
        %s203 = sand.u32 %s94, 1
        %s204 = smul.addr %s203, 16
        %s205 = scalar_lea.vmem [#allocation6], %s204
        %s206 = smul.u32 2, %s18
        %s207 = ssub.s32 3, %s206
        %p208 = scmp.lt.s32.totalorder %s207, 2
        %s209 = scalar_select %p208, %s207, 2
        %s210 = smul.u32 128, %s209
        %s211 = smul.u32 2, %s18
        %s212 = ssub.s32 3, %s211
        %p213 = scmp.lt.s32.totalorder %s212, 2
        %s214 = scalar_select %p213, %s212, 2
        %s215 = smul.u32 128, %s214
        %v217 = vld [vmem:[%s180] sm:$0xff]
        %v218 = vld [vmem:[%s180 + $0x8] sm:$0xff]
        %v219 = vpack.c.bf16 %v218, %v217
        %v220 = vld [vmem:[#allocation4] sm:$0xf]
        %v221 = vld [vmem:[#allocation4 + $0x4] sm:$0xf]
        %v222 = vld [vmem:[#allocation4 + $0x8] sm:$0xf]
        %v223 = vld [vmem:[#allocation4 + $0xc] sm:$0xf]
        %v224 = vld [vmem:[#allocation4 + $0x10] sm:$0xf]
        %v225 = vld [vmem:[#allocation4 + $0x14] sm:$0xf]
        %v226 = vld [vmem:[#allocation4 + $0x18] sm:$0xf]
        %v227 = vld [vmem:[#allocation4 + $0x1c] sm:$0xf]
        %v228 = vld [vmem:[%s2] sm:$0x1]
        %v230 = vlaneseq
        %v231 = vshrl.u32 %v230, 7
        %v232 = vsub.s32 0, %v231
        %v233 = vrot.slane %v228, %v232
        %v243 = vunpack.c.l.b16 %v220
        %v244 = vunpack.c.l.b16 %v221
        %v245 = vunpack.c.l.b16 %v222
        %v246 = vunpack.c.l.b16 %v223
        %v247 = vunpack.c.l.b16 %v224
        %v248 = vunpack.c.l.b16 %v225
        %v249 = vunpack.c.l.b16 %v226
        %v250 = vunpack.c.l.b16 %v227
        %v251 = vpack.c.b16 %v244, %v243
        %v252 = vpack.c.b16 %v246, %v245
        %v253 = vpack.c.b16 %v248, %v247
        %v254 = vpack.c.b16 %v250, %v249
        %vm259 = vcmask 523264
        %v261 = vsel %vm259, %v219, 0
        %263 = vmatprep.subr.bf16.mxu0 0
        %264 = vmatpush1.bf16.msra.mxu0 %v251
        %265 = vmatprep.subr.bf16.mxu0 0
        %266 = vmatpush1.bf16.msra.mxu0 %v252
        %267 = vmatprep.subr.bf16.mxu0 0
        %268 = vmatpush1.bf16.msra.mxu0 %v253
        %269 = vmatprep.subr.bf16.mxu0 0
        %270 = vmatpush1.bf16.msra.mxu0 %v254
        %271 = vmatprep.subr.bf16.mxu0 0
        %272 = vmatpush1.bf16.msra.mxu0 0
        %273 = vmatprep.subr.bf16.mxu0 0
        %274 = vmatpush1.bf16.msra.mxu0 0
        %275 = vmatprep.subr.bf16.mxu0 0
        %276 = vmatpush1.bf16.msra.mxu0 0
        %277 = vmatprep.subr.bf16.mxu0 0
        %278 = vmatpush1.bf16.msra.mxu0 0
        %279 = vmatprep.subr.bf16.mxu0 0
        %280 = vmatpush1.bf16.msra.mxu0 0
        %281 = vmatprep.subr.bf16.mxu0 0
        %282 = vmatpush1.bf16.msra.mxu0 0
        %283 = vmatprep.subr.bf16.mxu0 0
        %284 = vmatpush1.bf16.msra.mxu0 0
        %285 = vmatprep.subr.bf16.mxu0 0
        %286 = vmatpush1.bf16.msra.mxu0 0
        %287 = vmatprep.subr.bf16.mxu0 0
        %288 = vmatpush1.bf16.msra.mxu0 0
        %289 = vmatprep.subr.bf16.mxu0 0
        %290 = vmatpush1.bf16.msra.mxu0 0
        %291 = vmatprep.subr.bf16.mxu0 0
        %292 = vmatpush1.bf16.msra.mxu0 0
        %293 = vmatprep.subr.bf16.mxu0 0
        %294 = vmatpush1.bf16.msra.mxu0 0
        %295 = vmatprep.mubr.bf16.mxu0 0
        %296 = vmatmul.mubr.bf16.gmra.mrb[0].mxu0 %v261
        %v297 = vpop.f32.mrb[0].mxu0
        %v298 = vadd.f32 %v233, %v297
        %v299 = vpop.f32.mrb[0].mxu0
        %v300 = vpop.f32.mrb[0].mxu0
        %v301 = vadd.f32 %v233, %v300
        %v302 = vpop.f32.mrb[0].mxu0
        %303 = vdwg.mxu0
        %304 = vmax.xlane.f32.xlu0 %v298
        %v305 = vpop.xlane.xlu0 %304
        %306 = vmax.xlane.f32.xlu0 %v301
        %v307 = vpop.xlane.xlu0 %306
        %v308 = vsub.f32 %v298, %v305
        %v309 = vsub.f32 %v301, %v307
        %v310 = vmul.f32 %v308, 1.442695
        %v311 = vpow.pop %v310
        %v312 = vmul.f32 %v309, 1.442695
        %v313 = vpow.pop %v312
        %314 = vadd.xlane.f32.xlu0 %v311
        %v315 = vpop.xlane.xlu0 %314
        %316 = vadd.xlane.f32.xlu0 %v313
        %v317 = vpop.xlane.xlu0 %316
        %v318 = vrcp.pop %v315
        %v319 = vrcp.pop %v317
        %v320 = vmul.f32 %v311, %v318
        %v321 = vmul.f32 %v313, %v319
        %vm322 = vcmask 80896
        %323 = vst.msk [vmem:[%s205] sm:$0xff] %vm322, %v320
        %324 = vst.msk [vmem:[%s205 + $0x8] sm:$0xff] %vm322, %v321
        %s325 = sand.u32 %s94, 1
        %s326 = sand.u32 %s94, 1
        %s327 = smul.addr %s326, 16
        %s328 = scalar_lea.vmem [#allocation6], %s327
        // Predicated region
        $region41: #{tpu_custom_call.1} parent=31 // pred_check
          %p329 = pneg %p104
        $region42: #{tpu_custom_call.1} parent=31 // pred_check_branch
          %331 = sbr.rel (%p329) target = $region44
        $region43: #{tpu_custom_call.1} parent=31 // pred_region
          %s332 = smul.u32 2, %s18
          %s333 = ssub.s32 3, %s332
          %p334 = scmp.lt.s32.totalorder %s333, 2
          %s335 = scalar_select %p334, %s333, 2
          %s336 = smul.u32 128, %s335
          %p337 = scmp.ne.s32.totalorder 0, %s336
          %s338 = smul.addr %s332, 8
          %s339 = scalar_lea.vmem %s3, %s338
          // Predicated region
          $region45: #{tpu_custom_call.1} parent=43 // pred_check
            %p340 = pneg %p337
          $region46: #{tpu_custom_call.1} parent=43 // pred_check_branch
            %342 = sbr.rel (%p340) target = $region48
          $region47: #{tpu_custom_call.1} parent=43 // pred_region
            // Predicated region
            $region49: #{tpu_custom_call.1} parent=47 // pred_check
              _
            $region50: #{tpu_custom_call.1} parent=47 // pred_check_branch
              %344 = sbr.rel (0) target = $region52
            $region51: #{tpu_custom_call.1} parent=47 // pred_region
              // Predicated region
              $region71: #{tpu_custom_call.1} parent=51 // pred_check
                _
              $region72: #{tpu_custom_call.1} parent=51 // pred_check_branch
                %395 = sbr.rel (0) target = $region74
              $region73: #{tpu_custom_call.1} parent=51 // pred_region
                %s396 = sshrl.u32 %s335, 1
                // While loop
                $region75: #{tpu_custom_call.1} parent=73 // loop_pre_header
                  _
                $region76: #{tpu_custom_call.1} parent=73 // loop_header
                  %s398 = sphi 0, %s400
                  %p399 = scmp.ge.s32.totalorder %s398, %s396
                  %s403 = sphi 0, %s412
                  %s404 = sphi %s328, %s415
                  %s405 = sphi %s339, %s416
                $region77: #{tpu_custom_call.1} parent=73 // loop_header_branch
                  %402 = sbr.rel (%p399) target = $region81
                $region78: #{tpu_custom_call.1} parent=73 // loop_body
                  %v406 = vld [vmem:[%s404] sm:$0xff]
                  %407 = vst [vmem:[%s405] sm:$0xff] %v406
                  %v408 = vld [vmem:[%s404 + $0x8] sm:$0xff]
                  %409 = vst [vmem:[%s405 + $0x8] sm:$0xff] %v408
                  %s410 = sadd.s32 1, %s403
                  %p411 = scmp.ge.s32.totalorder %s410, %s396
                  %s412 = scalar_select %p411, 0, %s410
                  %s413 = smul.u32 %s412, 16
                  %s414 = smul.u32 %s412, 16
                  %s415 = scalar_lea.vmem %s328, %s413 [#allocation6]
                  %s416 = scalar_lea.vmem %s339, %s414
                $region79: #{tpu_custom_call.1} parent=73 // loop_footer
                  %s400 = sadd.s32 %s398, 1
                $region80: #{tpu_custom_call.1} parent=73 // loop_footer_branch
                  %397 = sbr.rel target = $region76
                $region81: #{tpu_custom_call.1} parent=73 // loop_exit
                  _
                %s417 = sshrl.u32 %s335, 1
                %s418 = sand.u32 %s335, 1
                %s419 = smul.u32 %s417, 2
                %s420 = smul.u32 8, %s419
                %s421 = scalar_lea.vmem %s328, %s420 [#allocation6]
                %s422 = smul.u32 8, %s419
                %s423 = scalar_lea.vmem %s339, %s422
                // While loop
                $region82: #{tpu_custom_call.1} parent=73 // loop_pre_header
                  _
                $region83: #{tpu_custom_call.1} parent=73 // loop_header
                  %s425 = sphi 0, %s427
                  %p426 = scmp.ge.s32.totalorder %s425, %s418
                  %s430 = sphi 0, %s437
                  %s431 = sphi %s421, %s440
                  %s432 = sphi %s423, %s441
                $region84: #{tpu_custom_call.1} parent=73 // loop_header_branch
                  %429 = sbr.rel (%p426) target = $region88
                $region85: #{tpu_custom_call.1} parent=73 // loop_body
                  %v433 = vld [vmem:[%s431] sm:$0xff]
                  %434 = vst [vmem:[%s432] sm:$0xff] %v433
                  %s435 = sadd.s32 1, %s430
                  %p436 = scmp.ge.s32.totalorder %s435, %s418
                  %s437 = scalar_select %p436, 0, %s435
                  %s438 = smul.u32 %s437, 8
                  %s439 = smul.u32 %s437, 8
                  %s440 = scalar_lea.vmem %s421, %s438 [#allocation6]
                  %s441 = scalar_lea.vmem %s423, %s439
                $region86: #{tpu_custom_call.1} parent=73 // loop_footer
                  %s427 = sadd.s32 %s425, 1
                $region87: #{tpu_custom_call.1} parent=73 // loop_footer_branch
                  %424 = sbr.rel target = $region83
                $region88: #{tpu_custom_call.1} parent=73 // loop_exit
                  _
              $region74: #{tpu_custom_call.1} parent=51 // pred_fallthru
                _
              // Predicated region
              $region89: #{tpu_custom_call.1} parent=51 // pred_check
                _
              $region90: #{tpu_custom_call.1} parent=51 // pred_check_branch
                %443 = sbr.rel target = $region92
              $region91: #{tpu_custom_call.1} parent=51 // pred_region
                _
              $region92: #{tpu_custom_call.1} parent=51 // pred_fallthru
                _
            $region52: #{tpu_custom_call.1} parent=47 // pred_fallthru
              _
            // Predicated region
            $region53: #{tpu_custom_call.1} parent=47 // pred_check
              _
            $region54: #{tpu_custom_call.1} parent=47 // pred_check_branch
              %346 = sbr.rel target = $region56
            $region55: #{tpu_custom_call.1} parent=47 // pred_region
              %s348 = sshrl.u32 %s335, 1
              // While loop
              $region57: #{tpu_custom_call.1} parent=55 // loop_pre_header
                _
              $region58: #{tpu_custom_call.1} parent=55 // loop_header
                %s350 = sphi 0, %s352
                %p351 = scmp.ge.s32.totalorder %s350, %s348
                %s355 = sphi 0, %s364
                %s356 = sphi %s328, %s367
                %s357 = sphi %s339, %s368
              $region59: #{tpu_custom_call.1} parent=55 // loop_header_branch
                %354 = sbr.rel (%p351) target = $region63
              $region60: #{tpu_custom_call.1} parent=55 // loop_body
                %v358 = vld [vmem:[%s356] sm:$0xff]
                %359 = vst [vmem:[%s357] sm:$0xff] %v358
                %v360 = vld [vmem:[%s356 + $0x8] sm:$0xff]
                %361 = vst [vmem:[%s357 + $0x8] sm:$0xff] %v360
                %s362 = sadd.s32 1, %s355
                %p363 = scmp.ge.s32.totalorder %s362, %s348
                %s364 = scalar_select %p363, 0, %s362
                %s365 = smul.u32 %s364, 16
                %s366 = smul.u32 %s364, 16
                %s367 = scalar_lea.vmem %s328, %s365 [#allocation6]
                %s368 = scalar_lea.vmem %s339, %s366
              $region61: #{tpu_custom_call.1} parent=55 // loop_footer
                %s352 = sadd.s32 %s350, 1
              $region62: #{tpu_custom_call.1} parent=55 // loop_footer_branch
                %349 = sbr.rel target = $region58
              $region63: #{tpu_custom_call.1} parent=55 // loop_exit
                _
              %s369 = sshrl.u32 %s335, 1
              %s370 = sand.u32 %s335, 1
              %s371 = smul.u32 %s369, 2
              %s372 = smul.u32 8, %s371
              %s373 = scalar_lea.vmem %s328, %s372 [#allocation6]
              %s374 = smul.u32 8, %s371
              %s375 = scalar_lea.vmem %s339, %s374
              // While loop
              $region64: #{tpu_custom_call.1} parent=55 // loop_pre_header
                _
              $region65: #{tpu_custom_call.1} parent=55 // loop_header
                %s377 = sphi 0, %s379
                %p378 = scmp.ge.s32.totalorder %s377, %s370
                %s382 = sphi 0, %s389
                %s383 = sphi %s373, %s392
                %s384 = sphi %s375, %s393
              $region66: #{tpu_custom_call.1} parent=55 // loop_header_branch
                %381 = sbr.rel (%p378) target = $region70
              $region67: #{tpu_custom_call.1} parent=55 // loop_body
                %v385 = vld [vmem:[%s383] sm:$0xff]
                %386 = vst [vmem:[%s384] sm:$0xff] %v385
                %s387 = sadd.s32 1, %s382
                %p388 = scmp.ge.s32.totalorder %s387, %s370
                %s389 = scalar_select %p388, 0, %s387
                %s390 = smul.u32 %s389, 8
                %s391 = smul.u32 %s389, 8
                %s392 = scalar_lea.vmem %s373, %s390 [#allocation6]
                %s393 = scalar_lea.vmem %s375, %s391
              $region68: #{tpu_custom_call.1} parent=55 // loop_footer
                %s379 = sadd.s32 %s377, 1
              $region69: #{tpu_custom_call.1} parent=55 // loop_footer_branch
                %376 = sbr.rel target = $region65
              $region70: #{tpu_custom_call.1} parent=55 // loop_exit
                _
            $region56: #{tpu_custom_call.1} parent=47 // pred_fallthru
              _
          $region48: #{tpu_custom_call.1} parent=43 // pred_fallthru
            _
          %444 = vnop
        $region44: #{tpu_custom_call.1} parent=31 // pred_fallthru
          _
      $region32: #{tpu_custom_call.1} parent=5 // pred_fallthru
        _
      %p445 = scmp.le.s32.totalorder 2, %s13
      // Predicated region
      $region93: #{tpu_custom_call.1} parent=5 // pred_check
        %p446 = pneg %p445
      $region94: #{tpu_custom_call.1} parent=5 // pred_check_branch
        %448 = sbr.rel (%p446) target = $region96
      $region95: #{tpu_custom_call.1} parent=5 // pred_region
        %s449 = ssub.s32 %s13, 2
        // Predicated region
        $region97: #{tpu_custom_call.1} parent=95 // pred_check
          %p450 = pneg %p110
        $region98: #{tpu_custom_call.1} parent=95 // pred_check_branch
          %452 = sbr.rel (%p450) target = $region100
        $region99: #{tpu_custom_call.1} parent=95 // pred_region
          %s453 = sand.u32 %s95, 1
          %s454 = sand.u32 %s95, 1
          %s455 = smul.addr %s454, 16
          %s456 = scalar_lea.vmem [#allocation6], %s455
        $region100: #{tpu_custom_call.1} parent=95 // pred_fallthru
          _
      $region96: #{tpu_custom_call.1} parent=5 // pred_fallthru
        _
    $region6: #{tpu_custom_call.1} parent=1 // loop_footer
      %s17 = sadd.s32 1, %s13
    $region7: #{tpu_custom_call.1} parent=1 // loop_footer_branch
      %12 = sbr.rel target = $region3
    $region8: #{tpu_custom_call.1} parent=1 // loop_exit
      _
    %457 = vsyncpa [#allocation3], 1
    %s458 = scalar_lea.sflag [#allocation3], 1
    %459 = vsyncpa %s458, 1
    %460 = vsyncpa [#allocation5], 1

</llo_original>
